<compile_context>
chip_gen: v7x
topology: tpu7x:2x2x1
jax: 0.10.0
libtpu: 0.0.40
codegen_flags: <defaults>
</compile_context>

<pallas_src>
import functools
from typing import NamedTuple, Optional, Union

import jax
import jax.numpy as jnp
from jax import lax
from jax.experimental import pallas as pl
from jax.experimental.pallas import tpu as pltpu

SIM_LOSS_WEIGHT = 25.0   # args.sim_loss_weight
COV_LOSS_WEIGHT = 1.0    # args.cov_loss_weight


def _round_up(x, m):
    return ((x + m - 1) // m) * m


def _vmem_capacity_bytes():
    """Trace-time VMEM capacity; conservative 64 MiB fallback (v7x per-TC)."""
    try:
        info = pltpu.get_tpu_info()
        cap = getattr(info, "vmem_capacity_bytes", None)
        if cap:
            return int(cap)
    except Exception:
        pass
    return 64 * 1024 * 1024


def _vmem_limit_bytes(cap):
    # ~96 MiB on 128 MiB parts (v5e/v6e), ~48 MiB on 64 MiB parts (v7x).
    return max(min((cap * 3) // 4, cap - (8 << 20)), 16 << 20)


def _choose_tk(batch, f_dim, d_dim, vmem_limit, x_itemsize=4, w_itemsize=2):
    """Largest K tile (multiple of 128) whose streaming buffers fit the budget."""
    gram = min(batch, d_dim)
    fixed = (2 * batch * d_dim * 4        # resident f32 accumulator (2, B, D)
             + batch * d_dim * 4          # one epilogue (B, D) temporary
             + gram * gram * 4            # Gram
             + (2 << 20))                 # slack (Mosaic internal scratch etc.)
    per_tk = 2 * (2 * batch * x_itemsize) + 2 * d_dim * w_itemsize
    budget = max(vmem_limit - fixed, 0)
    tk = int(budget // per_tk) if per_tk > 0 else 128
    tk = (tk // 128) * 128
    tk = max(128, min(tk, _round_up(f_dim, 128), 2048))
    return tk


class PreparedProjector(NamedTuple):
    """Padded/cast projector weight, built once and reused across steps."""
    w: jax.Array            # (Fp, D) compute dtype; zero-padded along F to Fp = kt*tk
    f_true: int
    d_true: int
    tk: int
    vmem_limit_bytes: int


def prepare_covdet_projector(w, *, batch_size, compute_dtype=jnp.bfloat16,
                             tk: Optional[int] = None):
    f_dim, d_dim = w.shape
    cap = _vmem_capacity_bytes()
    vmem_limit = _vmem_limit_bytes(cap)
    if tk is None:
        tk = _choose_tk(batch_size, f_dim, d_dim, vmem_limit,
                        x_itemsize=4,
                        w_itemsize=jnp.dtype(compute_dtype).itemsize)
    f_pad = _round_up(f_dim, tk)
    wp = w.astype(compute_dtype)
    if f_pad != f_dim:
        # Zero rows beyond the true F; together with in-kernel lane masking of x
        # the ragged last K tile contributes exactly zero.
        wp = jnp.pad(wp, ((0, f_pad - f_dim), (0, 0)))
    return PreparedProjector(w=wp, f_true=f_dim, d_true=d_dim, tk=tk,
                             vmem_limit_bytes=int(vmem_limit))


# ----------------------------------------------------------------------------
# Fused kernel (single pallas_call, K tiled on the grid):
#   z1 = x1 @ W ; z2 = x2 @ W        (bf16 MXU operands, f32 VMEM accumulator)
#   sim_loss = mean((z1 - z2)^2)
#   cov_loss = offdiag(Cov(z1))^2.sum()/D + offdiag(Cov(z2))^2.sum()/D
#   loss     = sim_w * sim_loss + cov_w * cov_loss
# Bias is omitted on purpose: it cancels in z1 - z2 and under column centering.
# ----------------------------------------------------------------------------
def _covdet_fused_kernel(x1_ref, x2_ref, w_ref, out_ref, z_acc, *,
                         n_rows, f_true, d_true, tk, needs_mask, compute_dtype):
    k = pl.program_id(0)

    @pl.when(k == 0)
    def _init():
        z_acc[...] = jnp.zeros_like(z_acc)

    x1 = x1_ref[...]
    x2 = x2_ref[...]
    if needs_mask:
        # Ragged final F tile: zero lanes beyond the true feature dim (the
        # prepared weight rows there are zero as well).
        col = lax.broadcasted_iota(jnp.int32, (1, tk), 1)
        valid = (k * tk + col) < f_true
        x1 = jnp.where(valid, x1, 0.0)
        x2 = jnp.where(valid, x2, 0.0)
    x1 = x1.astype(compute_dtype)
    x2 = x2.astype(compute_dtype)
    w = w_ref[...]

    # MXU: bf16 operands, f32 accumulation into the resident VMEM scratch.
    z_acc[0] += jnp.dot(x1, w, preferred_element_type=jnp.float32)
    z_acc[1] += jnp.dot(x2, w, preferred_element_type=jnp.float32)

    @pl.when(k == pl.num_programs(0) - 1)
    def _epilogue():
        z1 = z_acc[0]
        z2 = z_acc[1]

        # Invariance (similarity) loss: MSE(z1, z2).
        diff = z1 - z2
        sim_loss = jnp.sum(diff * diff) * (1.0 / float(n_rows * d_true))

        # Center columns in place (bounds live ranges, no extra (2B, D) temps).
        z_acc[0] = z1 - jnp.mean(z1, axis=0, keepdims=True)
        z_acc[1] = z2 - jnp.mean(z2, axis=0, keepdims=True)

        inv_nm1 = 1.0 / float(n_rows - 1)

        def _offdiag_sq(zc):
            if n_rows <= d_true:
                # N x N Gram: ||Zc Zc^T||_F^2 == ||Zc^T Zc||_F^2; contraction over
                # the lane (D) axis -> no XLU transpose, tiny (B, B) temporary.
                g = lax.dot_general(zc, zc, (((1,), (1,)), ((), ())),
                                    preferred_element_type=jnp.float32)
                total = jnp.sum(g * g) * (inv_nm1 * inv_nm1)
                diag = jnp.sum(zc * zc, axis=0) * inv_nm1
                # TODO(synk): total - sum(diag^2) cancels catastrophically once the
                # off-diagonals get tiny late in training; for the monitored scalar
                # consider a tiled D x D masked Gram in that regime.
                return (total - jnp.sum(diag * diag)) * (1.0 / float(d_true))
            else:
                # Small D x D Gram with explicit diagonal masking (no cancellation).
                cov = lax.dot_general(zc, zc, (((0,), (0,)), ((), ())),
                                      preferred_element_type=jnp.float32) * inv_nm1
                row = lax.broadcasted_iota(jnp.int32, cov.shape, 0)
                col = lax.broadcasted_iota(jnp.int32, cov.shape, 1)
                off = jnp.where(row == col, 0.0, cov)
                return jnp.sum(off * off) * (1.0 / float(d_true))

        cov_loss = _offdiag_sq(z_acc[0]) + _offdiag_sq(z_acc[1])

        out_ref[0] = sim_loss
        out_ref[1] = cov_loss
        out_ref[2] = SIM_LOSS_WEIGHT * sim_loss + COV_LOSS_WEIGHT * cov_loss


# ----------------------------------------------------------------------------
# Covdet.covdet_forward equivalent
# ----------------------------------------------------------------------------
def covdet_forward(pos_1, pos_2, w: Union[jax.Array, PreparedProjector], b=None,
                   *, compute_dtype=jnp.bfloat16):
    """Returns (loss, sim_loss.detach(), cov_loss.detach()).

    `b` is accepted for parity with the torch linear projector but never used:
    the bias cancels exactly in z1 - z2 (sim loss) and under column-mean
    centering (cov loss), so it is neither DMA'd nor added.
    """
    del b
    B = pos_1.shape[0]
    if B < 2:
        raise ValueError("covdet_forward needs batch >= 2 (cov uses 1/(N-1)).")

    if not isinstance(w, PreparedProjector):
        # One-time cast/pad of the projector weight. In a training loop call
        # prepare_covdet_projector() once and reuse it so W is not re-cast /
        # re-padded (an un-hidden extra HBM pass of the dominant stream) per step.
        w = prepare_covdet_projector(w, batch_size=B, compute_dtype=compute_dtype)
    proj = w

    f_true, d_true, tk = proj.f_true, proj.d_true, proj.tk
    f_pad = proj.w.shape[0]
    kt = f_pad // tk
    needs_mask = (f_true % tk) != 0

    # torch .view(B, -1) row-major flatten; no other wrapper-side copies of x.
    x1 = pos_1.reshape(B, -1)
    x2 = pos_2.reshape(B, -1)

    kernel = functools.partial(
        _covdet_fused_kernel, n_rows=B, f_true=f_true, d_true=d_true, tk=tk,
        needs_mask=needs_mask, compute_dtype=compute_dtype)

    x_itemsize = jnp.dtype(x1.dtype).itemsize
    w_itemsize = jnp.dtype(proj.w.dtype).itemsize
    cost = pl.CostEstimate(
        flops=2 * (2 * B) * f_pad * d_true + 4 * B * d_true * min(B, d_true),
        transcendentals=0,
        bytes_accessed=2 * B * f_true * x_itemsize + f_pad * d_true * w_itemsize + 3 * 4,
    )

    out = pl.pallas_call(
        kernel,
        out_shape=jax.ShapeDtypeStruct((3,), jnp.float32),
        grid_spec=pltpu.PrefetchScalarGridSpec(
            num_scalar_prefetch=0,
            grid=(kt,),
            in_specs=[
                pl.BlockSpec((B, tk), lambda k: (0, k)),       # view-1 rows (native dtype)
                pl.BlockSpec((B, tk), lambda k: (0, k)),       # view-2 rows
                pl.BlockSpec((tk, d_true), lambda k: (k, 0)),  # prepared bf16 weights
            ],
            out_specs=pl.BlockSpec(memory_space=pltpu.MemorySpace.SMEM),
            scratch_shapes=[pltpu.VMEM((2, B, d_true), jnp.float32)],
        ),
        compiler_params=pltpu.CompilerParams(
            dimension_semantics=("arbitrary",),        # K is a reduction axis
            vmem_limit_bytes=proj.vmem_limit_bytes,
        ),
        cost_estimate=cost,
    )(x1, x2, proj.w)

    # FullGatherLayer (all_gather + cat) is the identity on a single device.
    # TODO(synk): multi-device would all-gather z (make_async_remote_copy ring)
    # and tile the Gram over the global batch before the loss epilogue.
    # TODO(synk): on v7x, add a leading size-2 "parallel" grid axis splitting the
    # two views across the chip's two TensorCores (per-view z + Gram per core,
    # sim cross-term via per-core partial sums) and combine the scalars outside.
    sim_loss, cov_loss, loss = out[0], out[1], out[2]
    return loss, lax.stop_gradient(sim_loss), lax.stop_gradient(cov_loss)


def covdet_module_forward(pos_1, pos_2=None, w=None, b=None):
    if pos_2 is None:
        # TODO(synk): linear_forward path (frozen backbone + linear head +
        # cross-entropy + top-k accuracy) not exercised here.
        raise NotImplementedError("linear_forward path not implemented")
    return covdet_forward(pos_1, pos_2, w, b)


if __name__ == "__main__":
    # Small shapes consistent with the module: two augmented NCHW views.
    # F = 2*24*24 = 1152 is deliberately NOT a multiple of tk=256 so the ragged
    # final K tile (lane-masked in-kernel) is exercised; D = 32 exercises the
    # unpadded small projector dim.
    B, C, H, W = 8, 2, 24, 24
    D = 32

    key = jax.random.PRNGKey(0)
    k1, k2, k3, k4 = jax.random.split(key, 4)
    pos_1 = jax.random.normal(k1, (B, C, H, W), dtype=jnp.float32)
    pos_2 = pos_1 + 0.1 * jax.random.normal(k2, (B, C, H, W), dtype=jnp.float32)

    F_dim = C * H * W
    w = 0.05 * jax.random.normal(k3, (F_dim, D), dtype=jnp.float32)
    b = 0.01 * jax.random.normal(k4, (1, D), dtype=jnp.float32)

    # One-time weight prep (cast + F padding). tk forced small here to exercise
    # multi-tile K accumulation; in production leave tk=None (VMEM-budget sized).
    proj = prepare_covdet_projector(w, batch_size=B, tk=256)

    loss, sim_loss, cov_loss = covdet_module_forward(pos_1, pos_2, w=proj, b=b)
    jax.block_until_ready((loss, sim_loss, cov_loss))

    # Pure-JAX reference with the same bf16-operand / f32-accumulate backbone and
    # explicit off-diagonal masking (closest to the PyTorch losses). It includes
    # the bias, which cancels mathematically in both losses.
    def ref(pos_1, pos_2, w, b):
        x1 = pos_1.reshape(B, -1).astype(jnp.bfloat16)
        x2 = pos_2.reshape(B, -1).astype(jnp.bfloat16)
        wl = w.astype(jnp.bfloat16)
        z1 = jnp.dot(x1, wl, preferred_element_type=jnp.float32) + b
        z2 = jnp.dot(x2, wl, preferred_element_type=jnp.float32) + b
        sim = jnp.mean((z1 - z2) ** 2)

        def off(z):
            zc = z - z.mean(0, keepdims=True)
            cov = zc.T @ zc / (B - 1)
            mask = 1.0 - jnp.eye(D, dtype=cov.dtype)
            return jnp.sum((cov * mask) ** 2) / D

        cov = off(z1) + off(z2)
        return SIM_LOSS_WEIGHT * sim + COV_LOSS_WEIGHT * cov, sim, cov

    rl, rs, rc = ref(pos_1, pos_2, w, b)
    assert jnp.allclose(loss, rl, rtol=2e-3, atol=1e-5), (loss, rl)
    assert jnp.allclose(sim_loss, rs, rtol=2e-3, atol=1e-5), (sim_loss, rs)
    assert jnp.allclose(cov_loss, rc, rtol=2e-3, atol=1e-5), (cov_loss, rc)

    print("KERNEL_OK")
</pallas_src>

<mosaic_0001>
module attributes {stable_mosaic.version = 11 : i64} {
  func.func @_covdet_fused_kernel(%arg0: i32, %arg1: memref<8x256xf32, #tpu.memory_space<vmem>>, %arg2: memref<8x256xf32, #tpu.memory_space<vmem>>, %arg3: memref<256x32xbf16, #tpu.memory_space<vmem>>, %arg4: memref<3xf32, #tpu.memory_space<smem>>, %arg5: memref<2x8x32xf32, #tpu.memory_space<vmem>>) attributes {dimension_semantics = [#tpu.dimension_semantics<arbitrary>], iteration_bounds = array<i64: 5>, scalar_prefetch = 0 : i64, scratch_operands = 1 : i64, tpu.core_type = #tpu.core_type<tc>, window_params = [{transform_indices = @transform_0, window_bounds = array<i64: 8, 256>}, {transform_indices = @transform_1, window_bounds = array<i64: 8, 256>}, {transform_indices = @transform_2, window_bounds = array<i64: 256, 32>}, {transform_indices = @transform_3, window_bounds = array<i64: 3>}]} {
    %c0_i32 = arith.constant 0 : i32
    %0 = arith.cmpi eq, %arg0, %c0_i32 : i32
    %1 = arith.extui %0 : i1 to i32
    %c0_i32_0 = arith.constant 0 : i32
    %2 = arith.cmpi ne, %1, %c0_i32_0 : i32
    scf.if %2 {
      %cst_21 = arith.constant 0.000000e+00 : f32
      %39 = vector.broadcast %cst_21 : f32 to vector<2x8x32xf32>
      %c0_22 = arith.constant 0 : index
      %c0_23 = arith.constant 0 : index
      %c0_24 = arith.constant 0 : index
      %40 = vector.load %arg5[%c0_22, %c0_23, %c0_24] : memref<2x8x32xf32, #tpu.memory_space<vmem>>, vector<2x8x32xf32>
      tpu.vector_store %arg5[%c0_22, %c0_23, %c0_24], %39 {strides = array<i32>} : memref<2x8x32xf32, #tpu.memory_space<vmem>>, vector<2x8x32xf32>,
    } else {
    }
    %c0 = arith.constant 0 : index
    %c0_1 = arith.constant 0 : index
    %3 = vector.load %arg1[%c0, %c0_1] : memref<8x256xf32, #tpu.memory_space<vmem>>, vector<8x256xf32>
    %c0_2 = arith.constant 0 : index
    %c0_3 = arith.constant 0 : index
    %4 = vector.load %arg2[%c0_2, %c0_3] : memref<8x256xf32, #tpu.memory_space<vmem>>, vector<8x256xf32>
    %5 = tpu.iota {dimensions = array<i32: 1>} : vector<1x256xi32>
    %c256_i32 = arith.constant 256 : i32
    %6 = arith.muli %arg0, %c256_i32 : i32
    %7 = vector.broadcast %6 : i32 to vector<1x256xi32>
    %8 = arith.addi %7, %5 : vector<1x256xi32>
    %c1152_i32 = arith.constant 1152 : i32
    %9 = vector.broadcast %c1152_i32 : i32 to vector<1x256xi32>
    %10 = arith.cmpi slt, %8, %9 : vector<1x256xi32>
    %cst = arith.constant 0.000000e+00 : f32
    %11 = vector.shape_cast %10 : vector<1x256xi1> to vector<1x256xi1>
    %12 = vector.broadcast %11 : vector<1x256xi1> to vector<8x256xi1>
    %13 = vector.broadcast %cst : f32 to vector<8x256xf32>
    %14 = arith.select %12, %3, %13 : vector<8x256xi1>, vector<8x256xf32>
    %cst_4 = arith.constant 0.000000e+00 : f32
    %15 = vector.shape_cast %10 : vector<1x256xi1> to vector<1x256xi1>
    %16 = vector.broadcast %15 : vector<1x256xi1> to vector<8x256xi1>
    %17 = vector.broadcast %cst_4 : f32 to vector<8x256xf32>
    %18 = arith.select %16, %4, %17 : vector<8x256xi1>, vector<8x256xf32>
    %19 = arith.truncf %14 : vector<8x256xf32> to vector<8x256xbf16>
    %20 = arith.truncf %18 : vector<8x256xf32> to vector<8x256xbf16>
    %c0_5 = arith.constant 0 : index
    %c0_6 = arith.constant 0 : index
    %21 = vector.load %arg3[%c0_5, %c0_6] : memref<256x32xbf16, #tpu.memory_space<vmem>>, vector<256x32xbf16>
    %c0_7 = arith.constant 0 : index
    %c0_8 = arith.constant 0 : index
    %c0_9 = arith.constant 0 : index
    %22 = vector.load %arg5[%c0_7, %c0_8, %c0_9] : memref<2x8x32xf32, #tpu.memory_space<vmem>>, vector<1x8x32xf32>
    %23 = vector.shape_cast %22 : vector<1x8x32xf32> to vector<8x32xf32>
    %cst_10 = arith.constant dense<0.000000e+00> : vector<8x32xf32>
    %24 = tpu.matmul %19, %21, %cst_10 {dimension_numbers = #tpu.dot_dimension_numbers<[1], [0], [0], [1], [0, 0, 1, 1], [], []>} : vector<8x256xbf16>, vector<256x32xbf16>, vector<8x32xf32> -> vector<8x32xf32>
    %25 = arith.addf %23, %24 : vector<8x32xf32>
    %c0_11 = arith.constant 0 : index
    %c0_12 = arith.constant 0 : index
    %c0_13 = arith.constant 0 : index
    %26 = vector.load %arg5[%c0_11, %c0_12, %c0_13] : memref<2x8x32xf32, #tpu.memory_space<vmem>>, vector<1x8x32xf32>
    %27 = vector.shape_cast %26 : vector<1x8x32xf32> to vector<8x32xf32>
    %28 = vector.shape_cast %25 : vector<8x32xf32> to vector<1x8x32xf32>
    tpu.vector_store %arg5[%c0_11, %c0_12, %c0_13], %28 {strides = array<i32>} : memref<2x8x32xf32, #tpu.memory_space<vmem>>, vector<1x8x32xf32>,
    %c1 = arith.constant 1 : index
    %c0_14 = arith.constant 0 : index
    %c0_15 = arith.constant 0 : index
    %29 = vector.load %arg5[%c1, %c0_14, %c0_15] : memref<2x8x32xf32, #tpu.memory_space<vmem>>, vector<1x8x32xf32>
    %30 = vector.shape_cast %29 : vector<1x8x32xf32> to vector<8x32xf32>
    %cst_16 = arith.constant dense<0.000000e+00> : vector<8x32xf32>
    %31 = tpu.matmul %20, %21, %cst_16 {dimension_numbers = #tpu.dot_dimension_numbers<[1], [0], [0], [1], [0, 0, 1, 1], [], []>} : vector<8x256xbf16>, vector<256x32xbf16>, vector<8x32xf32> -> vector<8x32xf32>
    %32 = arith.addf %30, %31 : vector<8x32xf32>
    %c1_17 = arith.constant 1 : index
    %c0_18 = arith.constant 0 : index
    %c0_19 = arith.constant 0 : index
    %33 = vector.load %arg5[%c1_17, %c0_18, %c0_19] : memref<2x8x32xf32, #tpu.memory_space<vmem>>, vector<1x8x32xf32>
    %34 = vector.shape_cast %33 : vector<1x8x32xf32> to vector<8x32xf32>
    %35 = vector.shape_cast %32 : vector<8x32xf32> to vector<1x8x32xf32>
    tpu.vector_store %arg5[%c1_17, %c0_18, %c0_19], %35 {strides = array<i32>} : memref<2x8x32xf32, #tpu.memory_space<vmem>>, vector<1x8x32xf32>,
    %c4_i32 = arith.constant 4 : i32
    %36 = arith.cmpi eq, %arg0, %c4_i32 : i32
    %37 = arith.extui %36 : i1 to i32
    %c0_i32_20 = arith.constant 0 : i32
    %38 = arith.cmpi ne, %37, %c0_i32_20 : i32
    scf.if %38 {
      %c0_21 = arith.constant 0 : index
      %c0_22 = arith.constant 0 : index
      %c0_23 = arith.constant 0 : index
      %39 = vector.load %arg5[%c0_21, %c0_22, %c0_23] : memref<2x8x32xf32, #tpu.memory_space<vmem>>, vector<1x8x32xf32>
      %40 = vector.shape_cast %39 : vector<1x8x32xf32> to vector<8x32xf32>
      %c1_24 = arith.constant 1 : index
      %c0_25 = arith.constant 0 : index
      %c0_26 = arith.constant 0 : index
      %41 = vector.load %arg5[%c1_24, %c0_25, %c0_26] : memref<2x8x32xf32, #tpu.memory_space<vmem>>, vector<1x8x32xf32>
      %42 = vector.shape_cast %41 : vector<1x8x32xf32> to vector<8x32xf32>
      %43 = arith.subf %40, %42 : vector<8x32xf32>
      %44 = arith.mulf %43, %43 : vector<8x32xf32>
      %45 = vector.shape_cast %44 : vector<8x32xf32> to vector<1x8x32xf32>
      %cst_27 = arith.constant dense<0.000000e+00> : vector<1xf32>
      %46 = vector.multi_reduction <add>, %45, %cst_27 [1, 2] : vector<1x8x32xf32> to vector<1xf32>
      %47 = vector.shape_cast %46 : vector<1xf32> to vector<1x1x1xf32>
      %48 = vector.extract %47[0, 0, 0] : f32 from vector<1x1x1xf32>
      %cst_28 = arith.constant 3.906250e-03 : f32
      %49 = arith.mulf %48, %cst_28 : f32
      %cst_29 = arith.constant dense<0.000000e+00> : vector<32xf32>
      %50 = vector.multi_reduction <add>, %40, %cst_29 [0] : vector<8x32xf32> to vector<32xf32>
      %51 = vector.shape_cast %50 : vector<32xf32> to vector<1x32xf32>
      %cst_30 = arith.constant 8.000000e+00 : f32
      %52 = vector.broadcast %cst_30 : f32 to vector<1x32xf32>
      %53 = arith.divf %51, %52 : vector<1x32xf32>
      %54 = vector.broadcast %53 : vector<1x32xf32> to vector<8x32xf32>
      %55 = arith.subf %40, %54 : vector<8x32xf32>
      %c0_31 = arith.constant 0 : index
      %c0_32 = arith.constant 0 : index
      %c0_33 = arith.constant 0 : index
      %56 = vector.load %arg5[%c0_31, %c0_32, %c0_33] : memref<2x8x32xf32, #tpu.memory_space<vmem>>, vector<1x8x32xf32>
      %57 = vector.shape_cast %56 : vector<1x8x32xf32> to vector<8x32xf32>
      %58 = vector.shape_cast %55 : vector<8x32xf32> to vector<1x8x32xf32>
      tpu.vector_store %arg5[%c0_31, %c0_32, %c0_33], %58 {strides = array<i32>} : memref<2x8x32xf32, #tpu.memory_space<vmem>>, vector<1x8x32xf32>,
      %cst_34 = arith.constant dense<0.000000e+00> : vector<32xf32>
      %59 = vector.multi_reduction <add>, %42, %cst_34 [0] : vector<8x32xf32> to vector<32xf32>
      %60 = vector.shape_cast %59 : vector<32xf32> to vector<1x32xf32>
      %cst_35 = arith.constant 8.000000e+00 : f32
      %61 = vector.broadcast %cst_35 : f32 to vector<1x32xf32>
      %62 = arith.divf %60, %61 : vector<1x32xf32>
      %63 = vector.broadcast %62 : vector<1x32xf32> to vector<8x32xf32>
      %64 = arith.subf %42, %63 : vector<8x32xf32>
      %c1_36 = arith.constant 1 : index
      %c0_37 = arith.constant 0 : index
      %c0_38 = arith.constant 0 : index
      %65 = vector.load %arg5[%c1_36, %c0_37, %c0_38] : memref<2x8x32xf32, #tpu.memory_space<vmem>>, vector<1x8x32xf32>
      %66 = vector.shape_cast %65 : vector<1x8x32xf32> to vector<8x32xf32>
      %67 = vector.shape_cast %64 : vector<8x32xf32> to vector<1x8x32xf32>
      tpu.vector_store %arg5[%c1_36, %c0_37, %c0_38], %67 {strides = array<i32>} : memref<2x8x32xf32, #tpu.memory_space<vmem>>, vector<1x8x32xf32>,
      %c0_39 = arith.constant 0 : index
      %c0_40 = arith.constant 0 : index
      %c0_41 = arith.constant 0 : index
      %68 = vector.load %arg5[%c0_39, %c0_40, %c0_41] : memref<2x8x32xf32, #tpu.memory_space<vmem>>, vector<1x8x32xf32>
      %69 = vector.shape_cast %68 : vector<1x8x32xf32> to vector<8x32xf32>
      %cst_42 = arith.constant dense<0.000000e+00> : vector<8x8xf32>
      %70 = tpu.matmul %69, %69, %cst_42 {dimension_numbers = #tpu.dot_dimension_numbers<[1], [1], [0], [0], [0, 0, 1, 0], [], []>} : vector<8x32xf32>, vector<8x32xf32>, vector<8x8xf32> -> vector<8x8xf32>
      %71 = arith.mulf %70, %70 : vector<8x8xf32>
      %72 = vector.shape_cast %71 : vector<8x8xf32> to vector<1x8x8xf32>
      %cst_43 = arith.constant dense<0.000000e+00> : vector<1xf32>
      %73 = vector.multi_reduction <add>, %72, %cst_43 [1, 2] : vector<1x8x8xf32> to vector<1xf32>
      %74 = vector.shape_cast %73 : vector<1xf32> to vector<1x1x1xf32>
      %75 = vector.extract %74[0, 0, 0] : f32 from vector<1x1x1xf32>
      %cst_44 = arith.constant 0.0204081628 : f32
      %76 = arith.mulf %75, %cst_44 : f32
      %77 = arith.mulf %69, %69 : vector<8x32xf32>
      %cst_45 = arith.constant dense<0.000000e+00> : vector<32xf32>
      %78 = vector.multi_reduction <add>, %77, %cst_45 [0] : vector<8x32xf32> to vector<32xf32>
      %cst_46 = arith.constant 0.142857149 : f32
      %79 = vector.broadcast %cst_46 : f32 to vector<32xf32>
      %80 = arith.mulf %78, %79 : vector<32xf32>
      %81 = arith.mulf %80, %80 : vector<32xf32>
      %82 = vector.shape_cast %81 : vector<32xf32> to vector<1x32xf32>
      %cst_47 = arith.constant dense<0.000000e+00> : vector<1xf32>
      %83 = vector.multi_reduction <add>, %82, %cst_47 [1] : vector<1x32xf32> to vector<1xf32>
      %84 = vector.shape_cast %83 : vector<1xf32> to vector<1x1xf32>
      %85 = vector.extract %84[0, 0] : f32 from vector<1x1xf32>
      %86 = arith.subf %76, %85 : f32
      %cst_48 = arith.constant 3.125000e-02 : f32
      %87 = arith.mulf %86, %cst_48 : f32
      %c1_49 = arith.constant 1 : index
      %c0_50 = arith.constant 0 : index
      %c0_51 = arith.constant 0 : index
      %88 = vector.load %arg5[%c1_49, %c0_50, %c0_51] : memref<2x8x32xf32, #tpu.memory_space<vmem>>, vector<1x8x32xf32>
      %89 = vector.shape_cast %88 : vector<1x8x32xf32> to vector<8x32xf32>
      %cst_52 = arith.constant dense<0.000000e+00> : vector<8x8xf32>
      %90 = tpu.matmul %89, %89, %cst_52 {dimension_numbers = #tpu.dot_dimension_numbers<[1], [1], [0], [0], [0, 0, 1, 0], [], []>} : vector<8x32xf32>, vector<8x32xf32>, vector<8x8xf32> -> vector<8x8xf32>
      %91 = arith.mulf %90, %90 : vector<8x8xf32>
      %92 = vector.shape_cast %91 : vector<8x8xf32> to vector<1x8x8xf32>
      %cst_53 = arith.constant dense<0.000000e+00> : vector<1xf32>
      %93 = vector.multi_reduction <add>, %92, %cst_53 [1, 2] : vector<1x8x8xf32> to vector<1xf32>
      %94 = vector.shape_cast %93 : vector<1xf32> to vector<1x1x1xf32>
      %95 = vector.extract %94[0, 0, 0] : f32 from vector<1x1x1xf32>
      %cst_54 = arith.constant 0.0204081628 : f32
      %96 = arith.mulf %95, %cst_54 : f32
      %97 = arith.mulf %89, %89 : vector<8x32xf32>
      %cst_55 = arith.constant dense<0.000000e+00> : vector<32xf32>
      %98 = vector.multi_reduction <add>, %97, %cst_55 [0] : vector<8x32xf32> to vector<32xf32>
      %cst_56 = arith.constant 0.142857149 : f32
      %99 = vector.broadcast %cst_56 : f32 to vector<32xf32>
      %100 = arith.mulf %98, %99 : vector<32xf32>
      %101 = arith.mulf %100, %100 : vector<32xf32>
      %102 = vector.shape_cast %101 : vector<32xf32> to vector<1x32xf32>
      %cst_57 = arith.constant dense<0.000000e+00> : vector<1xf32>
      %103 = vector.multi_reduction <add>, %102, %cst_57 [1] : vector<1x32xf32> to vector<1xf32>
      %104 = vector.shape_cast %103 : vector<1xf32> to vector<1x1xf32>
      %105 = vector.extract %104[0, 0] : f32 from vector<1x1xf32>
      %106 = arith.subf %96, %105 : f32
      %cst_58 = arith.constant 3.125000e-02 : f32
      %107 = arith.mulf %106, %cst_58 : f32
      %108 = arith.addf %87, %107 : f32
      %c0_59 = arith.constant 0 : index
      %109 = memref.load %arg4[%c0_59] : memref<3xf32, #tpu.memory_space<smem>>
      memref.store %49, %arg4[%c0_59] : memref<3xf32, #tpu.memory_space<smem>>
      %c1_60 = arith.constant 1 : index
      %110 = memref.load %arg4[%c1_60] : memref<3xf32, #tpu.memory_space<smem>>
      memref.store %108, %arg4[%c1_60] : memref<3xf32, #tpu.memory_space<smem>>
      %cst_61 = arith.constant 2.500000e+01 : f32
      %111 = arith.mulf %cst_61, %49 : f32
      %cst_62 = arith.constant 1.000000e+00 : f32
      %112 = arith.mulf %cst_62, %108 : f32
      %113 = arith.addf %111, %112 : f32
      %c2 = arith.constant 2 : index
      %114 = memref.load %arg4[%c2] : memref<3xf32, #tpu.memory_space<smem>>
      memref.store %113, %arg4[%c2] : memref<3xf32, #tpu.memory_space<smem>>
    } else {
    }
    return
  }
  func.func @transform_0(%arg0: i32) -> (i32, i32) {
    %c0_i32 = arith.constant 0 : i32
    %c0_i32_0 = arith.constant 0 : i32
    return %c0_i32, %arg0 : i32, i32
  }
  func.func @transform_1(%arg0: i32) -> (i32, i32) {
    %c0_i32 = arith.constant 0 : i32
    %c0_i32_0 = arith.constant 0 : i32
    return %c0_i32, %arg0 : i32, i32
  }
  func.func @transform_2(%arg0: i32) -> (i32, i32) {
    %c0_i32 = arith.constant 0 : i32
    %c0_i32_0 = arith.constant 0 : i32
    return %arg0, %c0_i32 : i32, i32
  }
  func.func @transform_3(%arg0: i32) -> i32 {
    %c0_i32 = arith.constant 0 : i32
    %c0_i32_0 = arith.constant 0 : i32
    return %c0_i32 : i32
  }
}

</mosaic_0001>

<llo_original>
// kernel: tpu_custom_call.1
$region0: #{tpu_custom_call.1}
  #allocation0 [shape = 'u32[]', space=smem, size = 0x4, offset = 0x4, fixed_abs, tag = 'smem constant byte address 0x4 - core index']
  #allocation1 [shape = 'u32[144,128]{1,0:T(1,128)}', space=vmem, size = 0x12000, scoped, tag = 'internal scratch']
  #allocation2 [shape = 'f32[2,8,32]{2,1,0:T(8,128)}', space=vmem, size = 0x2000, scoped, tag = 'scratch operand']
  %s0 = inlined_call_operand.vmem [shape: f32[8,1152], index: 0, kind: input, shape index: {}]
  %s1 = inlined_call_operand.vmem [shape: f32[8,1152], index: 1, kind: input, shape index: {}]
  %s2 = inlined_call_operand.vmem [shape: bf16[1280,32], index: 2, kind: input, shape index: {}]
  %s3 = inlined_call_operand.hbm [shape: f32[3], index: 3, kind: output, shape index: {}]
  %s4 = sld [smem:[#allocation0]]
  $region53: #{tpu_custom_call.1} parent=0
    _
  %s6 = ssub.s32 1, %s4
  %s7 = scalar_select 0, %s6, %s4
  $region1: #{tpu_custom_call.1} parent=0
    #allocation3 [shape = 'u8[512]{0}', space=smem, size = 0x200, scoped, tag = 'output window, operand 0, single buffered']
    #allocation4 [shape = 's32[2]{0}', space=sflag, size = 0x8, scoped, tag = 'scoped memory for tpu_custom_call.1']
    %8 = vsyncpa [#allocation4], 0
    loop: start=0, step=1, limit=7
    $region2: #{tpu_custom_call.1} parent=1 // loop_pre_header
      _
    $region3: #{tpu_custom_call.1} parent=1 // loop_header
      %s10 = sphi 0, %s14
      %p11 = scmp.ge.s32.totalorder %s10, 7
      %s20 = sphi 0, %s22
      %s23 = sphi 0, %s20
      %s24 = sphi 0, %s23
      %s40 = sphi 0, %s24
      %s46 = sphi 0, %s48
      %s49 = sphi 0, %s46
      %s50 = sphi 0, %s49
      %s66 = sphi 0, %s50
      %s72 = sphi 0, %s74
      %s75 = sphi 0, %s72
      %s76 = sphi 0, %s75
      %s92 = sphi 0, %s76
      %s96 = sphi 0, %s96
      %s98 = sphi 0, %s96
      %s99 = sphi 0, %s98
      %s113 = sphi 0, %s99
    $region4: #{tpu_custom_call.1} parent=1 // loop_header_branch
      %13 = sbr.rel (%p11) target = $region8
    $region5: #{tpu_custom_call.1} parent=1 // loop_body
      %s15 = ssub.s32 %s10, 1
      %s16 = ssub.s32 %s10, 2
      %s17 = sadd.s32 %s10, 1
      %s18 = ssub.s32 %s10, %s17
      %p19 = scmp.eq.s32.totalorder %s18, 0
      %s21 = sadd.s32 %s20, 1
      %s22 = scalar_select %p19, %s20, %s21
      %p25 = pneg %p19
      %p26 = scmp.eq.s32.totalorder %s10, 4
      %p27 = por %p25, %p26
      %p28 = scmp.ne.s32.totalorder %s20, %s23
      %p29 = scmp.eq.s32.totalorder %s10, 0
      %p30 = por %p28, %p29
      %p31 = scmp.ne.s32.totalorder %s20, %s23
      %p32 = scmp.eq.s32.totalorder %s15, 4
      %p33 = por %p31, %p32
      %p34 = scmp.ne.s32.totalorder %s23, %s24
      %p35 = scmp.eq.s32.totalorder %s15, 0
      %p36 = por %p34, %p35
      %p37 = scmp.ne.s32.totalorder %s23, %s24
      %p38 = scmp.eq.s32.totalorder %s16, 4
      %p39 = por %p37, %p38
      %p41 = scmp.ne.s32.totalorder %s24, %s40
      %p42 = scmp.eq.s32.totalorder %s16, 0
      %p43 = por %p41, %p42
      %s44 = ssub.s32 %s10, %s17
      %p45 = scmp.eq.s32.totalorder %s44, 0
      %s47 = sadd.s32 %s46, 1
      %s48 = scalar_select %p45, %s46, %s47
      %p51 = pneg %p45
      %p52 = scmp.eq.s32.totalorder %s10, 4
      %p53 = por %p51, %p52
      %p54 = scmp.ne.s32.totalorder %s46, %s49
      %p55 = scmp.eq.s32.totalorder %s10, 0
      %p56 = por %p54, %p55
      %p57 = scmp.ne.s32.totalorder %s46, %s49
      %p58 = scmp.eq.s32.totalorder %s15, 4
      %p59 = por %p57, %p58
      %p60 = scmp.ne.s32.totalorder %s49, %s50
      %p61 = scmp.eq.s32.totalorder %s15, 0
      %p62 = por %p60, %p61
      %p63 = scmp.ne.s32.totalorder %s49, %s50
      %p64 = scmp.eq.s32.totalorder %s16, 4
      %p65 = por %p63, %p64
      %p67 = scmp.ne.s32.totalorder %s50, %s66
      %p68 = scmp.eq.s32.totalorder %s16, 0
      %p69 = por %p67, %p68
      %s70 = ssub.s32 %s10, %s17
      %p71 = scmp.eq.s32.totalorder %s70, 0
      %s73 = sadd.s32 %s72, 1
      %s74 = scalar_select %p71, %s72, %s73
      %p77 = pneg %p71
      %p78 = scmp.eq.s32.totalorder %s10, 4
      %p79 = por %p77, %p78
      %p80 = scmp.ne.s32.totalorder %s72, %s75
      %p81 = scmp.eq.s32.totalorder %s10, 0
      %p82 = por %p80, %p81
      %p83 = scmp.ne.s32.totalorder %s72, %s75
      %p84 = scmp.eq.s32.totalorder %s15, 4
      %p85 = por %p83, %p84
      %p86 = scmp.ne.s32.totalorder %s75, %s76
      %p87 = scmp.eq.s32.totalorder %s15, 0
      %p88 = por %p86, %p87
      %p89 = scmp.ne.s32.totalorder %s75, %s76
      %p90 = scmp.eq.s32.totalorder %s16, 4
      %p91 = por %p89, %p90
      %p93 = scmp.ne.s32.totalorder %s76, %s92
      %p94 = scmp.eq.s32.totalorder %s16, 0
      %p95 = por %p93, %p94
      %s97 = sadd.s32 %s96, 1
      %p100 = scmp.eq.s32.totalorder %s10, 4
      %p101 = scmp.ne.s32.totalorder %s96, %s98
      %p102 = scmp.eq.s32.totalorder %s10, 0
      %p103 = por %p101, %p102
      %p104 = scmp.ne.s32.totalorder %s96, %s98
      %p105 = scmp.eq.s32.totalorder %s15, 4
      %p106 = por %p104, %p105
      %p107 = scmp.ne.s32.totalorder %s98, %s99
      %p108 = scmp.eq.s32.totalorder %s15, 0
      %p109 = por %p107, %p108
      %p110 = scmp.ne.s32.totalorder %s98, %s99
      %p111 = scmp.eq.s32.totalorder %s16, 4
      %p112 = por %p110, %p111
      %p114 = scmp.ne.s32.totalorder %s99, %s113
      %p115 = scmp.eq.s32.totalorder %s16, 0
      %p116 = por %p114, %p115
      %p117 = scmp.le.s32.totalorder 1, %s10
      %p118 = scmp.lt.s32.totalorder %s10, 6
      %p119 = pnand %p117, %p118
      %p120 = pneg %p119
      // Predicated region
      $region9: #{tpu_custom_call.1} parent=5 // pred_check
        _
      $region10: #{tpu_custom_call.1} parent=5 // pred_check_branch
        %122 = sbr.rel (%p119) target = $region12
      $region11: #{tpu_custom_call.1} parent=5 // pred_region
        %s123 = ssub.s32 %s10, 1
      $region12: #{tpu_custom_call.1} parent=5 // pred_fallthru
        _
      %p124 = scmp.lt.s32.totalorder %s10, 5
      // Predicated region
      $region13: #{tpu_custom_call.1} parent=5 // pred_check
        %p125 = pneg %p124
      $region14: #{tpu_custom_call.1} parent=5 // pred_check_branch
        %127 = sbr.rel (%p125) target = $region16
      $region15: #{tpu_custom_call.1} parent=5 // pred_region
        // Predicated region
        $region17: #{tpu_custom_call.1} parent=15 // pred_check
          %p128 = pneg %p30
        $region18: #{tpu_custom_call.1} parent=15 // pred_check_branch
          %130 = sbr.rel (%p128) target = $region20
        $region19: #{tpu_custom_call.1} parent=15 // pred_region
          %s131 = smul.u32 2, %s10
          %s132 = ssub.s32 9, %s131
          %p133 = scmp.lt.s32.totalorder %s132, 2
          %s134 = scalar_select %p133, %s132, 2
          %s135 = smul.u32 128, %s134
          %p136 = scmp.lt.s32.totalorder %s131, 8
          %s137 = scalar_select %p136, %s131, 8
          %s138 = smul.addr %s137, 8
          %s139 = scalar_lea.vmem %s0, %s138
          %s140 = smul.u32 2, %s10
          %s141 = ssub.s32 9, %s140
          %p142 = scmp.lt.s32.totalorder %s141, 2
          %s143 = scalar_select %p142, %s141, 2
          %s144 = smul.u32 128, %s143
        $region20: #{tpu_custom_call.1} parent=15 // pred_fallthru
          _
        // Predicated region
        $region21: #{tpu_custom_call.1} parent=15 // pred_check
          %p145 = pneg %p56
        $region22: #{tpu_custom_call.1} parent=15 // pred_check_branch
          %147 = sbr.rel (%p145) target = $region24
        $region23: #{tpu_custom_call.1} parent=15 // pred_region
          %s148 = smul.u32 2, %s10
          %s149 = ssub.s32 9, %s148
          %p150 = scmp.lt.s32.totalorder %s149, 2
          %s151 = scalar_select %p150, %s149, 2
          %s152 = smul.u32 128, %s151
          %p153 = scmp.lt.s32.totalorder %s148, 8
          %s154 = scalar_select %p153, %s148, 8
          %s155 = smul.addr %s154, 8
          %s156 = scalar_lea.vmem %s1, %s155
          %s157 = smul.u32 2, %s10
          %s158 = ssub.s32 9, %s157
          %p159 = scmp.lt.s32.totalorder %s158, 2
          %s160 = scalar_select %p159, %s158, 2
          %s161 = smul.u32 128, %s160
        $region24: #{tpu_custom_call.1} parent=15 // pred_fallthru
          _
        // Predicated region
        $region25: #{tpu_custom_call.1} parent=15 // pred_check
          %p162 = pneg %p82
        $region26: #{tpu_custom_call.1} parent=15 // pred_check_branch
          %164 = sbr.rel (%p162) target = $region28
        $region27: #{tpu_custom_call.1} parent=15 // pred_region
          %s165 = smul.u32 32, %s10
          %p166 = scmp.lt.s32.totalorder %s165, 159
          %s167 = scalar_select %p166, %s165, 159
          %s168 = smul.addr %s167, 4
          %s169 = scalar_lea.vmem %s2, %s168
          %s170 = smul.u32 32, %s10
        $region28: #{tpu_custom_call.1} parent=15 // pred_fallthru
          _
      $region16: #{tpu_custom_call.1} parent=5 // pred_fallthru
        _
      %p171 = scmp.le.s32.totalorder 1, %s10
      %p172 = scmp.lt.s32.totalorder %s10, 6
      %p173 = pnand %p171, %p172
      %p174 = pneg %p173
      // Predicated region
      $region29: #{tpu_custom_call.1} parent=5 // pred_check
        _
      $region30: #{tpu_custom_call.1} parent=5 // pred_check_branch
        %176 = sbr.rel (%p173) target = $region32
      $region31: #{tpu_custom_call.1} parent=5 // pred_region
        %s177 = ssub.s32 %s10, 1
        %s178 = smul.u32 2, %s15
        %s179 = ssub.s32 9, %s178
        %p180 = scmp.lt.s32.totalorder %s179, 2
        %s181 = scalar_select %p180, %s179, 2
        %s182 = smul.u32 128, %s181
        %p183 = scmp.lt.s32.totalorder %s178, 8
        %s184 = scalar_select %p183, %s178, 8
        %s185 = smul.addr %s184, 8
        %s186 = scalar_lea.vmem %s0, %s185
        %p187 = pneg %p36
        %p188 = pneg %p33
        %s189 = smul.u32 2, %s15
        %s190 = ssub.s32 9, %s189
        %p191 = scmp.lt.s32.totalorder %s190, 2
        %s192 = scalar_select %p191, %s190, 2
        %s193 = smul.u32 128, %s192
        %p194 = scmp.lt.s32.totalorder %s189, 8
        %s195 = scalar_select %p194, %s189, 8
        %s196 = smul.addr %s195, 8
        %s197 = scalar_lea.vmem %s1, %s196
        %p198 = pneg %p62
        %p199 = pneg %p59
        %s200 = smul.u32 32, %s15
        %p201 = scmp.lt.s32.totalorder %s200, 159
        %s202 = scalar_select %p201, %s200, 159
        %s203 = smul.addr %s202, 4
        %s204 = scalar_lea.vmem %s2, %s203
        %p205 = pneg %p88
        %p206 = pneg %p85
        %p207 = pneg %p109
        %p208 = pneg %p106
        %s209 = smul.u32 2, %s15
        %s210 = ssub.s32 9, %s209
        %p211 = scmp.lt.s32.totalorder %s210, 2
        %s212 = scalar_select %p211, %s210, 2
        %s213 = smul.u32 128, %s212
        %p214 = scmp.lt.s32.totalorder %s209, 8
        %s215 = scalar_select %p214, %s209, 8
        %s216 = smul.addr %s215, 8
        %s217 = scalar_lea.vmem %s0, %s216
        %s218 = smul.u32 2, %s15
        %s219 = ssub.s32 9, %s218
        %p220 = scmp.lt.s32.totalorder %s219, 2
        %s221 = scalar_select %p220, %s219, 2
        %s222 = smul.u32 128, %s221
        %s223 = smul.u32 2, %s15
        %s224 = ssub.s32 9, %s223
        %p225 = scmp.lt.s32.totalorder %s224, 2
        %s226 = scalar_select %p225, %s224, 2
        %s227 = smul.u32 128, %s226
        %p228 = scmp.lt.s32.totalorder %s223, 8
        %s229 = scalar_select %p228, %s223, 8
        %s230 = smul.addr %s229, 8
        %s231 = scalar_lea.vmem %s1, %s230
        %s232 = smul.u32 2, %s15
        %s233 = ssub.s32 9, %s232
        %p234 = scmp.lt.s32.totalorder %s233, 2
        %s235 = scalar_select %p234, %s233, 2
        %s236 = smul.u32 128, %s235
        %s237 = smul.u32 32, %s15
        %p238 = scmp.lt.s32.totalorder %s237, 159
        %s239 = scalar_select %p238, %s237, 159
        %s240 = smul.addr %s239, 4
        %s241 = scalar_lea.vmem %s2, %s240
        %s242 = smul.u32 32, %s15
        %p244 = scmp.eq.s32.totalorder %s15, 0
        // Predicated region
        $region33: #{tpu_custom_call.1} parent=31 // pred_check
          %p245 = pneg %p244
        $region34: #{tpu_custom_call.1} parent=31 // pred_check_branch
          %247 = sbr.rel (%p245) target = $region36
        $region35: #{tpu_custom_call.1} parent=31 // pred_region
          %vm248 = vcmask 261120
          %249 = vst.msk [vmem:[#allocation2] sm:$0xff] %vm248, 0.0
          %250 = vst.msk [vmem:[#allocation2 + $0x8] sm:$0xff] %vm248, 0.0
        $region36: #{tpu_custom_call.1} parent=31 // pred_fallthru
          _
        %v251 = vld [vmem:[%s217] sm:$0xff]
        %v252 = vld [vmem:[%s217 + $0x8] sm:$0xff]
        %v253 = vld [vmem:[%s231] sm:$0xff]
        %v254 = vld [vmem:[%s231 + $0x8] sm:$0xff]
        %v255 = vlaneseq
        %v256 = vand.u32 %v255, 127
        %v257 = vadd.s32 %v256, 128
        %s258 = smul.u32 %s15, 256
        %v259 = vstv %s258
        %v260 = vadd.s32 %v259, %v256
        %v261 = vadd.s32 %v259, %v257
        %vm262 = vcmp.lt.s32.totalorder %v260, 1152
        %vm263 = vcmp.lt.s32.totalorder %v261, 1152
        %v264 = vsel %vm262, 1, 0
        %v265 = vsel %vm263, 1, 0
        %vm266 = vcmp.eq.s32.totalorder %v264, 1
        %vm267 = vcmp.eq.s32.totalorder %v265, 1
        %v268 = vsel %vm266, %v251, 0.0
        %v269 = vsel %vm267, %v252, 0.0
        %v270 = vsel %vm266, %v253, 0.0
        %v271 = vsel %vm267, %v254, 0.0
        %v272 = vpack.c.bf16 %v268, %v268
        %v273 = vpack.c.bf16 %v269, %v269
        %v274 = vpack.c.bf16 %v270, %v270
        %v275 = vpack.c.bf16 %v271, %v271
        %v276 = vld [vmem:[%s241] sm:$0xf]
        %v277 = vld [vmem:[%s241 + $0x4] sm:$0xf]
        %v278 = vld [vmem:[%s241 + $0x8] sm:$0xf]
        %v279 = vld [vmem:[%s241 + $0xc] sm:$0xf]
        %v280 = vld [vmem:[%s241 + $0x10] sm:$0xf]
        %v281 = vld [vmem:[%s241 + $0x14] sm:$0xf]
        %v282 = vld [vmem:[%s241 + $0x18] sm:$0xf]
        %v283 = vld [vmem:[%s241 + $0x1c] sm:$0xf]
        %v284 = vld [vmem:[%s241 + $0x20] sm:$0xf]
        %v285 = vld [vmem:[%s241 + $0x24] sm:$0xf]
        %v286 = vld [vmem:[%s241 + $0x28] sm:$0xf]
        %v287 = vld [vmem:[%s241 + $0x2c] sm:$0xf]
        %v288 = vld [vmem:[%s241 + $0x30] sm:$0xf]
        %v289 = vld [vmem:[%s241 + $0x34] sm:$0xf]
        %v290 = vld [vmem:[%s241 + $0x38] sm:$0xf]
        %v291 = vld [vmem:[%s241 + $0x3c] sm:$0xf]
        %v292 = vld [vmem:[%s241 + $0x40] sm:$0xf]
        %v293 = vld [vmem:[%s241 + $0x44] sm:$0xf]
        %v294 = vld [vmem:[%s241 + $0x48] sm:$0xf]
        %v295 = vld [vmem:[%s241 + $0x4c] sm:$0xf]
        %v296 = vld [vmem:[%s241 + $0x50] sm:$0xf]
        %v297 = vld [vmem:[%s241 + $0x54] sm:$0xf]
        %v298 = vld [vmem:[%s241 + $0x58] sm:$0xf]
        %v299 = vld [vmem:[%s241 + $0x5c] sm:$0xf]
        %v300 = vld [vmem:[%s241 + $0x60] sm:$0xf]
        %v301 = vld [vmem:[%s241 + $0x64] sm:$0xf]
        %v302 = vld [vmem:[%s241 + $0x68] sm:$0xf]
        %v303 = vld [vmem:[%s241 + $0x6c] sm:$0xf]
        %v304 = vld [vmem:[%s241 + $0x70] sm:$0xf]
        %v305 = vld [vmem:[%s241 + $0x74] sm:$0xf]
        %v306 = vld [vmem:[%s241 + $0x78] sm:$0xf]
        %v307 = vld [vmem:[%s241 + $0x7c] sm:$0xf]
        %v308 = vld [vmem:[#allocation2] sm:$0xff]
        %v341 = vunpack.c.l.b16 %v276
        %v342 = vunpack.c.l.b16 %v277
        %v343 = vunpack.c.l.b16 %v278
        %v344 = vunpack.c.l.b16 %v279
        %v345 = vunpack.c.l.b16 %v280
        %v346 = vunpack.c.l.b16 %v281
        %v347 = vunpack.c.l.b16 %v282
        %v348 = vunpack.c.l.b16 %v283
        %v349 = vunpack.c.l.b16 %v284
        %v350 = vunpack.c.l.b16 %v285
        %v351 = vunpack.c.l.b16 %v286
        %v352 = vunpack.c.l.b16 %v287
        %v353 = vunpack.c.l.b16 %v288
        %v354 = vunpack.c.l.b16 %v289
        %v355 = vunpack.c.l.b16 %v290
        %v356 = vunpack.c.l.b16 %v291
        %v357 = vunpack.c.l.b16 %v292
        %v358 = vunpack.c.l.b16 %v293
        %v359 = vunpack.c.l.b16 %v294
        %v360 = vunpack.c.l.b16 %v295
        %v361 = vunpack.c.l.b16 %v296
        %v362 = vunpack.c.l.b16 %v297
        %v363 = vunpack.c.l.b16 %v298
        %v364 = vunpack.c.l.b16 %v299
        %v365 = vunpack.c.l.b16 %v300
        %v366 = vunpack.c.l.b16 %v301
        %v367 = vunpack.c.l.b16 %v302
        %v368 = vunpack.c.l.b16 %v303
        %v369 = vunpack.c.l.b16 %v304
        %v370 = vunpack.c.l.b16 %v305
        %v371 = vunpack.c.l.b16 %v306
        %v372 = vunpack.c.l.b16 %v307
        %v373 = vpack.c.b16 %v342, %v341
        %v374 = vpack.c.b16 %v344, %v343
        %v375 = vpack.c.b16 %v346, %v345
        %v376 = vpack.c.b16 %v348, %v347
        %v377 = vpack.c.b16 %v350, %v349
        %v378 = vpack.c.b16 %v352, %v351
        %v379 = vpack.c.b16 %v354, %v353
        %v380 = vpack.c.b16 %v356, %v355
        %v381 = vpack.c.b16 %v358, %v357
        %v382 = vpack.c.b16 %v360, %v359
        %v383 = vpack.c.b16 %v362, %v361
        %v384 = vpack.c.b16 %v364, %v363
        %v385 = vpack.c.b16 %v366, %v365
        %v386 = vpack.c.b16 %v368, %v367
        %v387 = vpack.c.b16 %v370, %v369
        %v388 = vpack.c.b16 %v372, %v371
        %405 = vmatprep.subr.bf16.mxu0 0
        %406 = vmatpush1.bf16.msra.mxu0 %v373
        %407 = vmatprep.subr.bf16.mxu0 0
        %408 = vmatpush1.bf16.msra.mxu0 %v374
        %409 = vmatprep.subr.bf16.mxu0 0
        %410 = vmatpush1.bf16.msra.mxu0 %v375
        %411 = vmatprep.subr.bf16.mxu0 0
        %412 = vmatpush1.bf16.msra.mxu0 %v376
        %413 = vmatprep.subr.bf16.mxu0 0
        %414 = vmatpush1.bf16.msra.mxu0 %v377
        %415 = vmatprep.subr.bf16.mxu0 0
        %416 = vmatpush1.bf16.msra.mxu0 %v378
        %417 = vmatprep.subr.bf16.mxu0 0
        %418 = vmatpush1.bf16.msra.mxu0 %v379
        %419 = vmatprep.subr.bf16.mxu0 0
        %420 = vmatpush1.bf16.msra.mxu0 %v380
        %421 = vmatprep.subr.bf16.mxu0 0
        %422 = vmatpush1.bf16.msra.mxu0 %v381
        %423 = vmatprep.subr.bf16.mxu0 0
        %424 = vmatpush1.bf16.msra.mxu0 %v382
        %425 = vmatprep.subr.bf16.mxu0 0
        %426 = vmatpush1.bf16.msra.mxu0 %v383
        %427 = vmatprep.subr.bf16.mxu0 0
        %428 = vmatpush1.bf16.msra.mxu0 %v384
        %429 = vmatprep.subr.bf16.mxu0 0
        %430 = vmatpush1.bf16.msra.mxu0 %v385
        %431 = vmatprep.subr.bf16.mxu0 0
        %432 = vmatpush1.bf16.msra.mxu0 %v386
        %433 = vmatprep.subr.bf16.mxu0 0
        %434 = vmatpush1.bf16.msra.mxu0 %v387
        %435 = vmatprep.subr.bf16.mxu0 0
        %436 = vmatpush1.bf16.msra.mxu0 %v388
        %437 = vmatprep.mubr.bf16.mxu0 %v273
        %438 = vmatmul.mubr.bf16.gmra.mrb[0].mxu0 %v272
        %v439 = vpop.f32.mrb[0].mxu0
        %v440 = vadd.f32 0.0, %v439
        %v441 = vpop.f32.mrb[0].mxu0
        %v442 = vpop.f32.mrb[0].mxu0
        %v443 = vpop.f32.mrb[0].mxu0
        %444 = vdwg.mxu0
        %v445 = vadd.f32 %v308, %v440
        %vm446 = vcmask 261120
        %447 = vst.msk [vmem:[#allocation2] sm:$0xff] %vm446, %v445
        %s448 = scalar_lea.vmem [#allocation2], 8
        %v449 = vld [vmem:[%s448] sm:$0xff]
        %450 = vmatprep.subr.bf16.mxu0 0
        %451 = vmatpush1.bf16.msra.mxu0 %v373
        %452 = vmatprep.subr.bf16.mxu0 0
        %453 = vmatpush1.bf16.msra.mxu0 %v374
        %454 = vmatprep.subr.bf16.mxu0 0
        %455 = vmatpush1.bf16.msra.mxu0 %v375
        %456 = vmatprep.subr.bf16.mxu0 0
        %457 = vmatpush1.bf16.msra.mxu0 %v376
        %458 = vmatprep.subr.bf16.mxu0 0
        %459 = vmatpush1.bf16.msra.mxu0 %v377
        %460 = vmatprep.subr.bf16.mxu0 0
        %461 = vmatpush1.bf16.msra.mxu0 %v378
        %462 = vmatprep.subr.bf16.mxu0 0
        %463 = vmatpush1.bf16.msra.mxu0 %v379
        %464 = vmatprep.subr.bf16.mxu0 0
        %465 = vmatpush1.bf16.msra.mxu0 %v380
        %466 = vmatprep.subr.bf16.mxu0 0
        %467 = vmatpush1.bf16.msra.mxu0 %v381
        %468 = vmatprep.subr.bf16.mxu0 0
        %469 = vmatpush1.bf16.msra.mxu0 %v382
        %470 = vmatprep.subr.bf16.mxu0 0
        %471 = vmatpush1.bf16.msra.mxu0 %v383
        %472 = vmatprep.subr.bf16.mxu0 0
        %473 = vmatpush1.bf16.msra.mxu0 %v384
        %474 = vmatprep.subr.bf16.mxu0 0
        %475 = vmatpush1.bf16.msra.mxu0 %v385
        %476 = vmatprep.subr.bf16.mxu0 0
        %477 = vmatpush1.bf16.msra.mxu0 %v386
        %478 = vmatprep.subr.bf16.mxu0 0
        %479 = vmatpush1.bf16.msra.mxu0 %v387
        %480 = vmatprep.subr.bf16.mxu0 0
        %481 = vmatpush1.bf16.msra.mxu0 %v388
        %482 = vmatprep.mubr.bf16.mxu0 %v275
        %483 = vmatmul.mubr.bf16.gmra.mrb[0].mxu0 %v274
        %v484 = vpop.f32.mrb[0].mxu0
        %v485 = vadd.f32 0.0, %v484
        %v486 = vpop.f32.mrb[0].mxu0
        %v487 = vpop.f32.mrb[0].mxu0
        %v488 = vpop.f32.mrb[0].mxu0
        %489 = vdwg.mxu0
        %v490 = vadd.f32 %v449, %v485
        %491 = vst.msk [vmem:[%s448] sm:$0xff] %vm446, %v490
        %p492 = scmp.eq.s32.totalorder %s15, 4
        // Predicated region
        $region37: #{tpu_custom_call.1} parent=31 // pred_check
          %p493 = pneg %p492
        $region38: #{tpu_custom_call.1} parent=31 // pred_check_branch
          %495 = sbr.rel (%p493) target = $region40
        $region39: #{tpu_custom_call.1} parent=31 // pred_region
          %v496 = vld [vmem:[#allocation2] sm:$0xff]
          %v497 = vld [vmem:[%s448] sm:$0xff]
          %v498 = vsub.f32 %v496, %v497
          %v499 = vmul.f32 %v498, %v498
          %v500 = vsel %vm446, %v499, 0.0
          %501 = vadd.xlane.f32.xlu0 %v500
          %v502 = vpop.xlane.xlu0 %501
          %v503 = vrot.slane %v502, 4
          %v504 = vadd.f32 %v502, %v503
          %v505 = vrot.slane %v504, 2
          %v506 = vadd.f32 %v504, %v505
          %v507 = vrot.slane %v506, 1
          %v508 = vadd.f32 %v506, %v507
          %s509 = vtos %v508
          %s510 = smul.f32 %s509, 0.00390625
          %v511 = vsel %vm446, %v496, 0.0
          %v512 = vrot.slane %v511, 4
          %v513 = vadd.f32 %v511, %v512
          %v514 = vrot.slane %v513, 2
          %v515 = vadd.f32 %v513, %v514
          %v516 = vrot.slane %v515, 1
          %v517 = vadd.f32 %v515, %v516
          %v518 = vrcp.pop 8.0
          %v519 = vmul.f32 %v517, %v518
          %v520 = vsub.f32 %v496, %v519
          %521 = vst.msk [vmem:[#allocation2] sm:$0xff] %vm446, %v520
          %v522 = vsel %vm446, %v497, 0.0
          %v523 = vrot.slane %v522, 4
          %v524 = vadd.f32 %v522, %v523
          %v525 = vrot.slane %v524, 2
          %v526 = vadd.f32 %v524, %v525
          %v527 = vrot.slane %v526, 1
          %v528 = vadd.f32 %v526, %v527
          %v529 = vmul.f32 %v528, %v518
          %v530 = vsub.f32 %v497, %v529
          %531 = vst.msk [vmem:[%s448] sm:$0xff] %vm446, %v530
          %v532 = vld [vmem:[#allocation2] sm:$0xff]
          %v534 = vsel %vm446, %v532, 0
          %536 = vmatprep.subr.mxu0 0.0
          %537 = vmatpush1.xpose.msra.mxu0 %v534
          %538 = vmatprep.subr.mxu0 0.0
          %539 = vmatpush1.xpose.msra.mxu0 0.0
          %540 = vmatprep.subr.mxu0 0.0
          %541 = vmatpush1.xpose.msra.mxu0 0.0
          %542 = vmatprep.subr.mxu0 0.0
          %543 = vmatpush1.xpose.msra.mxu0 0.0
          %544 = vmatprep.subr.mxu0 0.0
          %545 = vmatpush1.xpose.msra.mxu0 0.0
          %546 = vmatprep.subr.mxu0 0.0
          %547 = vmatpush1.xpose.msra.mxu0 0.0
          %548 = vmatprep.subr.mxu0 0.0
          %549 = vmatpush1.xpose.msra.mxu0 0.0
          %550 = vmatprep.subr.mxu0 0.0
          %551 = vmatpush1.xpose.msra.mxu0 0.0
          %552 = vmatprep.subr.mxu0 0.0
          %553 = vmatpush1.xpose.msra.mxu0 0.0
          %554 = vmatprep.subr.mxu0 0.0
          %555 = vmatpush1.xpose.msra.mxu0 0.0
          %556 = vmatprep.subr.mxu0 0.0
          %557 = vmatpush1.xpose.msra.mxu0 0.0
          %558 = vmatprep.subr.mxu0 0.0
          %559 = vmatpush1.xpose.msra.mxu0 0.0
          %560 = vmatprep.subr.mxu0 0.0
          %561 = vmatpush1.xpose.msra.mxu0 0.0
          %562 = vmatprep.subr.mxu0 0.0
          %563 = vmatpush1.xpose.msra.mxu0 0.0
          %564 = vmatprep.subr.mxu0 0.0
          %565 = vmatpush1.xpose.msra.mxu0 0.0
          %566 = vmatprep.subr.mxu0 0.0
          %567 = vmatpush1.xpose.msra.mxu0 0.0
          %568 = vmatprep.subr.mxu0 0.0
          %569 = vmatpush1.xpose.msra.mxu0 0.0
          %570 = vmatprep.subr.mxu0 0.0
          %571 = vmatpush1.xpose.msra.mxu0 0.0
          %572 = vmatprep.subr.mxu0 0.0
          %573 = vmatpush1.xpose.msra.mxu0 0.0
          %574 = vmatprep.subr.mxu0 0.0
          %575 = vmatpush1.xpose.msra.mxu0 0.0
          %576 = vmatprep.subr.mxu0 0.0
          %577 = vmatpush1.xpose.msra.mxu0 0.0
          %578 = vmatprep.subr.mxu0 0.0
          %579 = vmatpush1.xpose.msra.mxu0 0.0
          %580 = vmatprep.subr.mxu0 0.0
          %581 = vmatpush1.xpose.msra.mxu0 0.0
          %582 = vmatprep.subr.mxu0 0.0
          %583 = vmatpush1.xpose.msra.mxu0 0.0
          %584 = vmatprep.subr.mxu0 0.0
          %585 = vmatpush1.xpose.msra.mxu0 0.0
          %586 = vmatprep.subr.mxu0 0.0
          %587 = vmatpush1.xpose.msra.mxu0 0.0
          %588 = vmatprep.subr.mxu0 0.0
          %589 = vmatpush1.xpose.msra.mxu0 0.0
          %590 = vmatprep.subr.mxu0 0.0
          %591 = vmatpush1.xpose.msra.mxu0 0.0
          %592 = vmatprep.subr.mxu0 0.0
          %593 = vmatpush1.xpose.msra.mxu0 0.0
          %594 = vmatprep.subr.mxu0 0.0
          %595 = vmatpush1.xpose.msra.mxu0 0.0
          %596 = vmatprep.subr.mxu0 0.0
          %597 = vmatpush1.xpose.msra.mxu0 0.0
          %598 = vmatprep.subr.mxu0 0.0
          %599 = vmatpush1.xpose.msra.mxu0 0.0
          %600 = vmatprep.mubr.f32.mxu0 0.0
          %601 = vmatmul.mubr.f32.gmra.mrb[0].mxu0 %v534
          %v602 = vpop.f32.mrb[0].mxu0
          %v603 = vadd.f32 0.0, %v602
          %v604 = vpop.f32.mrb[0].mxu0
          %605 = vdwg.mxu0
          %v606 = vmul.f32 %v603, %v603
          %vm607 = vcmask 64512
          %v608 = vsel %vm607, %v606, 0.0
          %609 = vadd.xlane.f32.xlu0 %v608
          %v610 = vpop.xlane.xlu0 %609
          %v611 = vrot.slane %v610, 4
          %v612 = vadd.f32 %v610, %v611
          %v613 = vrot.slane %v612, 2
          %v614 = vadd.f32 %v612, %v613
          %v615 = vrot.slane %v614, 1
          %v616 = vadd.f32 %v614, %v615
          %s617 = vtos %v616
          %s618 = smul.f32 %s617, 0.020408163
          %v619 = vmul.f32 %v532, %v532
          %v620 = vsel %vm446, %v619, 0.0
          %v621 = vrot.slane %v620, 4
          %v622 = vadd.f32 %v620, %v621
          %v623 = vrot.slane %v622, 2
          %v624 = vadd.f32 %v622, %v623
          %v625 = vrot.slane %v624, 1
          %v626 = vadd.f32 %v624, %v625
          %v627 = vmul.f32 %v626, 0.14285715
          %v628 = vmul.f32 %v627, %v627
          %v629 = vsel %vm446, %v628, 0.0
          %630 = vadd.xlane.f32.xlu0 %v629
          %v631 = vpop.xlane.xlu0 %630
          %s632 = vtos %v631
          %s633 = ssub.f32 %s618, %s632
          %s634 = smul.f32 %s633, 0.03125
          %v635 = vld [vmem:[%s448] sm:$0xff]
          %v637 = vsel %vm446, %v635, 0
          %639 = vmatprep.subr.mxu0 0.0
          %640 = vmatpush1.xpose.msra.mxu0 %v637
          %641 = vmatprep.subr.mxu0 0.0
          %642 = vmatpush1.xpose.msra.mxu0 0.0
          %643 = vmatprep.subr.mxu0 0.0
          %644 = vmatpush1.xpose.msra.mxu0 0.0
          %645 = vmatprep.subr.mxu0 0.0
          %646 = vmatpush1.xpose.msra.mxu0 0.0
          %647 = vmatprep.subr.mxu0 0.0
          %648 = vmatpush1.xpose.msra.mxu0 0.0
          %649 = vmatprep.subr.mxu0 0.0
          %650 = vmatpush1.xpose.msra.mxu0 0.0
          %651 = vmatprep.subr.mxu0 0.0
          %652 = vmatpush1.xpose.msra.mxu0 0.0
          %653 = vmatprep.subr.mxu0 0.0
          %654 = vmatpush1.xpose.msra.mxu0 0.0
          %655 = vmatprep.subr.mxu0 0.0
          %656 = vmatpush1.xpose.msra.mxu0 0.0
          %657 = vmatprep.subr.mxu0 0.0
          %658 = vmatpush1.xpose.msra.mxu0 0.0
          %659 = vmatprep.subr.mxu0 0.0
          %660 = vmatpush1.xpose.msra.mxu0 0.0
          %661 = vmatprep.subr.mxu0 0.0
          %662 = vmatpush1.xpose.msra.mxu0 0.0
          %663 = vmatprep.subr.mxu0 0.0
          %664 = vmatpush1.xpose.msra.mxu0 0.0
          %665 = vmatprep.subr.mxu0 0.0
          %666 = vmatpush1.xpose.msra.mxu0 0.0
          %667 = vmatprep.subr.mxu0 0.0
          %668 = vmatpush1.xpose.msra.mxu0 0.0
          %669 = vmatprep.subr.mxu0 0.0
          %670 = vmatpush1.xpose.msra.mxu0 0.0
          %671 = vmatprep.subr.mxu0 0.0
          %672 = vmatpush1.xpose.msra.mxu0 0.0
          %673 = vmatprep.subr.mxu0 0.0
          %674 = vmatpush1.xpose.msra.mxu0 0.0
          %675 = vmatprep.subr.mxu0 0.0
          %676 = vmatpush1.xpose.msra.mxu0 0.0
          %677 = vmatprep.subr.mxu0 0.0
          %678 = vmatpush1.xpose.msra.mxu0 0.0
          %679 = vmatprep.subr.mxu0 0.0
          %680 = vmatpush1.xpose.msra.mxu0 0.0
          %681 = vmatprep.subr.mxu0 0.0
          %682 = vmatpush1.xpose.msra.mxu0 0.0
          %683 = vmatprep.subr.mxu0 0.0
          %684 = vmatpush1.xpose.msra.mxu0 0.0
          %685 = vmatprep.subr.mxu0 0.0
          %686 = vmatpush1.xpose.msra.mxu0 0.0
          %687 = vmatprep.subr.mxu0 0.0
          %688 = vmatpush1.xpose.msra.mxu0 0.0
          %689 = vmatprep.subr.mxu0 0.0
          %690 = vmatpush1.xpose.msra.mxu0 0.0
          %691 = vmatprep.subr.mxu0 0.0
          %692 = vmatpush1.xpose.msra.mxu0 0.0
          %693 = vmatprep.subr.mxu0 0.0
          %694 = vmatpush1.xpose.msra.mxu0 0.0
          %695 = vmatprep.subr.mxu0 0.0
          %696 = vmatpush1.xpose.msra.mxu0 0.0
          %697 = vmatprep.subr.mxu0 0.0
          %698 = vmatpush1.xpose.msra.mxu0 0.0
          %699 = vmatprep.subr.mxu0 0.0
          %700 = vmatpush1.xpose.msra.mxu0 0.0
          %701 = vmatprep.subr.mxu0 0.0
          %702 = vmatpush1.xpose.msra.mxu0 0.0
          %703 = vmatprep.mubr.f32.mxu0 0.0
          %704 = vmatmul.mubr.f32.gmra.mrb[0].mxu0 %v637
          %v705 = vpop.f32.mrb[0].mxu0
          %v706 = vadd.f32 0.0, %v705
          %v707 = vpop.f32.mrb[0].mxu0
          %708 = vdwg.mxu0
          %v709 = vmul.f32 %v706, %v706
          %v710 = vsel %vm607, %v709, 0.0
          %711 = vadd.xlane.f32.xlu0 %v710
          %v712 = vpop.xlane.xlu0 %711
          %v713 = vrot.slane %v712, 4
          %v714 = vadd.f32 %v712, %v713
          %v715 = vrot.slane %v714, 2
          %v716 = vadd.f32 %v714, %v715
          %v717 = vrot.slane %v716, 1
          %v718 = vadd.f32 %v716, %v717
          %s719 = vtos %v718
          %s720 = smul.f32 %s719, 0.020408163
          %v721 = vmul.f32 %v635, %v635
          %v722 = vsel %vm446, %v721, 0.0
          %v723 = vrot.slane %v722, 4
          %v724 = vadd.f32 %v722, %v723
          %v725 = vrot.slane %v724, 2
          %v726 = vadd.f32 %v724, %v725
          %v727 = vrot.slane %v726, 1
          %v728 = vadd.f32 %v726, %v727
          %v729 = vmul.f32 %v728, 0.14285715
          %v730 = vmul.f32 %v729, %v729
          %v731 = vsel %vm446, %v730, 0.0
          %732 = vadd.xlane.f32.xlu0 %v731
          %v733 = vpop.xlane.xlu0 %732
          %s734 = vtos %v733
          %s735 = ssub.f32 %s720, %s734
          %s736 = smul.f32 %s735, 0.03125
          %s737 = sadd.f32 %s634, %s736
          %s738 = scalar_lea.smem [#allocation3], 0
          %739 = sst [smem:[%s738]] %s510
          %s740 = scalar_lea.smem [#allocation3], 1
          %741 = sst [smem:[%s740]] %s737
          %s742 = smul.f32 %s510, 25.0
          %s743 = sadd.f32 %s742, %s737
          %s744 = scalar_lea.smem [#allocation3], 2
          %745 = sst [smem:[%s744]] %s743
        $region40: #{tpu_custom_call.1} parent=31 // pred_fallthru
          _
        // Predicated region
        $region41: #{tpu_custom_call.1} parent=31 // pred_check
          %p746 = pneg %p106
        $region42: #{tpu_custom_call.1} parent=31 // pred_check_branch
          %748 = sbr.rel (%p746) target = $region44
        $region43: #{tpu_custom_call.1} parent=31 // pred_region
          %s750 = ssub.s32 16, 16
          %751 = vsyncadd [#allocation4], %s750
          %754 = dma.smem_to_hbm [#allocation3], 16, %s3, [#allocation4]
        $region44: #{tpu_custom_call.1} parent=31 // pred_fallthru
          _
        // Predicated region
        $region45: #{tpu_custom_call.1} parent=31 // pred_check
          %p755 = pneg %p106
        $region46: #{tpu_custom_call.1} parent=31 // pred_check_branch
          %757 = sbr.rel (%p755) target = $region48
        $region47: #{tpu_custom_call.1} parent=31 // pred_region
          %758 = dma.done [#allocation4], 16
        $region48: #{tpu_custom_call.1} parent=31 // pred_fallthru
          _
        %759 = sfence
      $region32: #{tpu_custom_call.1} parent=5 // pred_fallthru
        _
      %p760 = scmp.le.s32.totalorder 2, %s10
      // Predicated region
      $region49: #{tpu_custom_call.1} parent=5 // pred_check
        %p761 = pneg %p760
      $region50: #{tpu_custom_call.1} parent=5 // pred_check_branch
        %763 = sbr.rel (%p761) target = $region52
      $region51: #{tpu_custom_call.1} parent=5 // pred_region
        %s764 = ssub.s32 %s10, 2
      $region52: #{tpu_custom_call.1} parent=5 // pred_fallthru
        _
    $region6: #{tpu_custom_call.1} parent=1 // loop_footer
      %s14 = sadd.s32 1, %s10
    $region7: #{tpu_custom_call.1} parent=1 // loop_footer_branch
      %9 = sbr.rel target = $region3
    $region8: #{tpu_custom_call.1} parent=1 // loop_exit
      _
    %765 = vsyncpa [#allocation4], 1
    %s766 = scalar_lea.sflag [#allocation4], 1
    %767 = vsyncpa %s766, 1

</llo_original>
